<compile_context>
chip_gen: v7x
topology: tpu7x:2x2x1
jax: 0.10.0
libtpu: 0.0.40
codegen_flags: <defaults>
</compile_context>

<pallas_src>
import functools

import jax
import jax.numpy as jnp
from jax import lax
from jax.experimental import pallas as pl
from jax.experimental.pallas import tpu as pltpu


# Contract the last dim of both operands: A @ B^T without materializing B^T.
_NT = (((1,), (1,)), ((), ()))


def _infonce_tiled_kernel(p1r_ref, p2r_ref, p1c_ref, p2c_ref, loss_ref,
                          z1r_sc, z2r_sc, pos_sc, dtop_sc, dbot_sc,
                          *, temperature, mm_dtype):
    """Grid = (row_tiles [parallel], col_tiles [arbitrary/reduction])."""
    inv_t = 1.0 / temperature
    j = pl.program_id(1)
    last_j = pl.num_programs(1) - 1

    # ---- per-row-tile setup (once per row tile, at the first column step) ----
    @pl.when(j == 0)
    def _():
        p1r = p1r_ref[...].astype(jnp.float32)            # [TR, D]
        p2r = p2r_ref[...].astype(jnp.float32)
        # F.normalize(x, p=2, dim=1): x / max(||x||, 1e-12)
        # max(sqrt(s), 1e-12) == sqrt(max(s, 1e-24)); rsqrt -> EUP slot.
        sq1 = jnp.sum(p1r * p1r, axis=1, keepdims=True)    # [TR, 1]
        sq2 = jnp.sum(p2r * p2r, axis=1, keepdims=True)
        r1 = lax.rsqrt(jnp.maximum(sq1, 1e-24))
        r2 = lax.rsqrt(jnp.maximum(sq2, 1e-24))
        z1r = p1r * r1                                     # unit rows (f32)
        z2r = p2r * r2
        z1r_sc[...] = z1r.astype(mm_dtype)                 # cached for all j
        z2r_sc[...] = z2r.astype(mm_dtype)
        # positives: sim[k, k+B] == <z1_k, z2_k>  (kept [TR, 1])
        pos_sc[...] = jnp.sum(z1r * z2r, axis=1, keepdims=True)
        # diag self-similarity d = sq * r^2 (1, or 0 for all-zero rows);
        # fold the -exp(d/T) diagonal exclusion into the accumulator init.
        dtop_sc[...] = -jnp.exp((sq1 * r1 * r1) * inv_t)
        dbot_sc[...] = -jnp.exp((sq2 * r2 * r2) * inv_t)

    # ---- streamed column blocks: normalize with 1/T folded into the scale ----
    p1c = p1c_ref[...].astype(jnp.float32)                 # [TC, D]
    p2c = p2c_ref[...].astype(jnp.float32)
    s1 = inv_t * lax.rsqrt(
        jnp.maximum(jnp.sum(p1c * p1c, axis=1, keepdims=True), 1e-24))
    s2 = inv_t * lax.rsqrt(
        jnp.maximum(jnp.sum(p2c * p2c, axis=1, keepdims=True), 1e-24))
    z1c = (p1c * s1).astype(mm_dtype)                      # rows of z1 / T
    z2c = (p2c * s2).astype(mm_dtype)

    z1r = z1r_sc[...]
    z2r = z2r_sc[...]
    # Four [TR, TC] blocks of sim/T (MXU, f32 accumulation, bf16 operands).
    sa = lax.dot_general(z1r, z1c, _NT, preferred_element_type=jnp.float32)
    sb = lax.dot_general(z1r, z2c, _NT, preferred_element_type=jnp.float32)
    sbt = lax.dot_general(z2r, z1c, _NT, preferred_element_type=jnp.float32)
    sc = lax.dot_general(z2r, z2c, _NT, preferred_element_type=jnp.float32)

    # Denominator row-sums; exp on EUP, lane-axis reductions stay [TR, 1].
    dtop_sc[...] += (jnp.sum(jnp.exp(sa), axis=1, keepdims=True)
                     + jnp.sum(jnp.exp(sb), axis=1, keepdims=True))
    dbot_sc[...] += (jnp.sum(jnp.exp(sbt), axis=1, keepdims=True)
                     + jnp.sum(jnp.exp(sc), axis=1, keepdims=True))

    # ---- finalize: per-row loss for rows k and k+B combined -------------------
    # -log(exp(pos/T)/denom_top) - log(exp(pos/T)/denom_bot)
    #   = log(denom_top) + log(denom_bot) - 2*pos/T
    @pl.when(j == last_j)
    def _():
        loss_ref[...] = (jnp.log(dtop_sc[...]) + jnp.log(dbot_sc[...])
                         - (2.0 * inv_t) * pos_sc[...])


def _pick_tile(b, target):
    """Largest multiple of 8 dividing b that is <= target, else b itself."""
    if b <= target:
        return b
    for cand in range(target, 7, -8):
        if b % cand == 0:
            return cand
    return b


def contrastive_loss(proj_1, proj_2, temperature=0.5, *,
                     use_bf16_matmul=True, row_tile=None, col_tile=None):
    """SimCLR InfoNCE loss. proj_1, proj_2: [batch, embedding_dim]."""
    assert proj_1.shape == proj_2.shape and proj_1.ndim == 2
    b, d = proj_1.shape
    tr = row_tile if row_tile is not None else _pick_tile(b, 128)
    tc = col_tile if col_tile is not None else _pick_tile(b, 256)
    assert b % tr == 0 and b % tc == 0

    mm_dtype = jnp.bfloat16 if use_bf16_matmul else jnp.float32
    kernel = functools.partial(_infonce_tiled_kernel,
                               temperature=float(temperature),
                               mm_dtype=mm_dtype)

    # Scoped-VMEM budget sized from the live set (double-buffered input tiles,
    # cached row blocks, live score/exp blocks, normalized column copies).
    in_bytes = jnp.dtype(proj_1.dtype).itemsize
    mm_bytes = 2 if use_bf16_matmul else 4
    vmem_bytes = (2 * 2 * (tr * d + tc * d) * in_bytes
                  + 2 * tr * d * mm_bytes
                  + 8 * tr * tc * 4
                  + 4 * tc * d * 4
                  + (4 << 20))
    vmem_limit = int(min(max(vmem_bytes, 32 << 20), 96 << 20))

    per_row = pl.pallas_call(
        kernel,
        out_shape=jax.ShapeDtypeStruct((b, 1), jnp.float32),
        grid_spec=pltpu.PrefetchScalarGridSpec(
            num_scalar_prefetch=0,
            grid=(b // tr, b // tc),
            in_specs=[
                pl.BlockSpec((tr, d), lambda i, j: (i, 0)),   # proj_1 row tile
                pl.BlockSpec((tr, d), lambda i, j: (i, 0)),   # proj_2 row tile
                pl.BlockSpec((tc, d), lambda i, j: (j, 0)),   # proj_1 col tile
                pl.BlockSpec((tc, d), lambda i, j: (j, 0)),   # proj_2 col tile
            ],
            out_specs=pl.BlockSpec((tr, 1), lambda i, j: (i, 0)),
            scratch_shapes=[
                pltpu.VMEM((tr, d), mm_dtype),     # normalized z1 row block
                pltpu.VMEM((tr, d), mm_dtype),     # normalized z2 row block
                pltpu.VMEM((tr, 1), jnp.float32),  # positives
                pltpu.VMEM((tr, 1), jnp.float32),  # denom (rows 0..B-1)
                pltpu.VMEM((tr, 1), jnp.float32),  # denom (rows B..2B-1)
            ]),
        compiler_params=pltpu.CompilerParams(
            dimension_semantics=("parallel", "arbitrary"),
            vmem_limit_bytes=vmem_limit),
    )(proj_1, proj_2, proj_1, proj_2)

    return jnp.sum(per_row) / (2.0 * b)


def _reference_loss(proj_1, proj_2, temperature=0.5):
    # Pure-JAX reference mirroring the PyTorch module, for sanity checking.
    b = proj_1.shape[0]

    def norm(x):
        return x / jnp.maximum(jnp.linalg.norm(x, axis=1, keepdims=True), 1e-12)

    z = jnp.concatenate([norm(proj_1), norm(proj_2)], axis=0)
    sim = z @ z.T
    sim_ij = jnp.diagonal(sim, offset=b)
    sim_ji = jnp.diagonal(sim, offset=-b)
    positives = jnp.concatenate([sim_ij, sim_ji], axis=0)
    nominator = jnp.exp(positives / temperature)
    mask = 1.0 - jnp.eye(2 * b, dtype=jnp.float32)
    denominator = jnp.sum(mask * jnp.exp(sim / temperature), axis=1)
    all_losses = -jnp.log(nominator / denominator)
    return jnp.sum(all_losses) / (2 * b)


if __name__ == "__main__":
    temperature = 0.5
    key = jax.random.PRNGKey(0)
    k1, k2, k3, k4 = jax.random.split(key, 4)

    # --- small demo shape (single-tile grid), f32 MXU path: tight tolerance ---
    batch, embedding_dim = 8, 128
    proj_1 = jax.random.normal(k1, (batch, embedding_dim), dtype=jnp.float32)
    proj_2 = jax.random.normal(k2, (batch, embedding_dim), dtype=jnp.float32)

    loss_f32 = contrastive_loss(proj_1, proj_2, temperature,
                                use_bf16_matmul=False)
    jax.block_until_ready(loss_f32)
    ref = _reference_loss(proj_1, proj_2, temperature)
    assert jnp.allclose(loss_f32, ref, rtol=1e-5, atol=1e-5), (loss_f32, ref)

    # Default fast path: bf16 MXU operands (looser tolerance per bf16 rounding).
    loss_bf16 = contrastive_loss(proj_1, proj_2, temperature)
    jax.block_until_ready(loss_bf16)
    assert jnp.allclose(loss_bf16, ref, rtol=2e-2, atol=2e-2), (loss_bf16, ref)

    # --- larger case exercising the row-parallel / column-streamed grid -------
    b2, d2 = 512, 128
    q1 = jax.random.normal(k3, (b2, d2), dtype=jnp.float32)
    q2 = jax.random.normal(k4, (b2, d2), dtype=jnp.float32)
    loss_big = contrastive_loss(q1, q2, temperature)        # grid (4, 2)
    jax.block_until_ready(loss_big)
    ref_big = _reference_loss(q1, q2, temperature)
    assert jnp.allclose(loss_big, ref_big, rtol=2e-2, atol=2e-2), (loss_big, ref_big)

    print("KERNEL_OK")
</pallas_src>

<mosaic_0001>
module attributes {stable_mosaic.version = 11 : i64} {
  func.func @_infonce_tiled_kernel(%arg0: i32, %arg1: i32, %arg2: memref<8x128xf32, #tpu.memory_space<vmem>>, %arg3: memref<8x128xf32, #tpu.memory_space<vmem>>, %arg4: memref<8x128xf32, #tpu.memory_space<vmem>>, %arg5: memref<8x128xf32, #tpu.memory_space<vmem>>, %arg6: memref<8x1xf32, #tpu.memory_space<vmem>>, %arg7: memref<8x128xf32, #tpu.memory_space<vmem>>, %arg8: memref<8x128xf32, #tpu.memory_space<vmem>>, %arg9: memref<8x1xf32, #tpu.memory_space<vmem>>, %arg10: memref<8x1xf32, #tpu.memory_space<vmem>>, %arg11: memref<8x1xf32, #tpu.memory_space<vmem>>) attributes {dimension_semantics = [#tpu.dimension_semantics<parallel>, #tpu.dimension_semantics<arbitrary>], iteration_bounds = array<i64: 1, 1>, scalar_prefetch = 0 : i64, scratch_operands = 5 : i64, tpu.core_type = #tpu.core_type<tc>, window_params = [{transform_indices = @transform_0, window_bounds = array<i64: 8, 128>}, {transform_indices = @transform_1, window_bounds = array<i64: 8, 128>}, {transform_indices = @transform_2, window_bounds = array<i64: 8, 128>}, {transform_indices = @transform_3, window_bounds = array<i64: 8, 128>}, {transform_indices = @transform_4, window_bounds = array<i64: 8, 1>}]} {
    %c0_i32 = arith.constant 0 : i32
    %0 = arith.cmpi eq, %arg1, %c0_i32 : i32
    %1 = arith.extui %0 : i1 to i32
    %c0_i32_0 = arith.constant 0 : i32
    %2 = arith.cmpi ne, %1, %c0_i32_0 : i32
    scf.if %2 {
      %c0_31 = arith.constant 0 : index
      %c0_32 = arith.constant 0 : index
      %54 = vector.load %arg2[%c0_31, %c0_32] : memref<8x128xf32, #tpu.memory_space<vmem>>, vector<8x128xf32>
      %c0_33 = arith.constant 0 : index
      %c0_34 = arith.constant 0 : index
      %55 = vector.load %arg3[%c0_33, %c0_34] : memref<8x128xf32, #tpu.memory_space<vmem>>, vector<8x128xf32>
      %56 = arith.mulf %54, %54 : vector<8x128xf32>
      %cst_35 = arith.constant dense<0.000000e+00> : vector<8xf32>
      %57 = vector.multi_reduction <add>, %56, %cst_35 [1] : vector<8x128xf32> to vector<8xf32>
      %58 = vector.shape_cast %57 : vector<8xf32> to vector<8x1xf32>
      %59 = arith.mulf %55, %55 : vector<8x128xf32>
      %cst_36 = arith.constant dense<0.000000e+00> : vector<8xf32>
      %60 = vector.multi_reduction <add>, %59, %cst_36 [1] : vector<8x128xf32> to vector<8xf32>
      %61 = vector.shape_cast %60 : vector<8xf32> to vector<8x1xf32>
      %cst_37 = arith.constant 1.000000e-24 : f32
      %62 = vector.broadcast %cst_37 : f32 to vector<8x1xf32>
      %63 = arith.maximumf %58, %62 : vector<8x1xf32>
      %64 = math.rsqrt %63 : vector<8x1xf32>
      %cst_38 = arith.constant 1.000000e-24 : f32
      %65 = vector.broadcast %cst_38 : f32 to vector<8x1xf32>
      %66 = arith.maximumf %61, %65 : vector<8x1xf32>
      %67 = math.rsqrt %66 : vector<8x1xf32>
      %68 = vector.broadcast %64 : vector<8x1xf32> to vector<8x128xf32>
      %69 = arith.mulf %54, %68 : vector<8x128xf32>
      %70 = vector.broadcast %67 : vector<8x1xf32> to vector<8x128xf32>
      %71 = arith.mulf %55, %70 : vector<8x128xf32>
      %c0_39 = arith.constant 0 : index
      %c0_40 = arith.constant 0 : index
      %72 = vector.load %arg7[%c0_39, %c0_40] : memref<8x128xf32, #tpu.memory_space<vmem>>, vector<8x128xf32>
      tpu.vector_store %arg7[%c0_39, %c0_40], %69 {strides = array<i32>} : memref<8x128xf32, #tpu.memory_space<vmem>>, vector<8x128xf32>,
      %c0_41 = arith.constant 0 : index
      %c0_42 = arith.constant 0 : index
      %73 = vector.load %arg8[%c0_41, %c0_42] : memref<8x128xf32, #tpu.memory_space<vmem>>, vector<8x128xf32>
      tpu.vector_store %arg8[%c0_41, %c0_42], %71 {strides = array<i32>} : memref<8x128xf32, #tpu.memory_space<vmem>>, vector<8x128xf32>,
      %74 = arith.mulf %69, %71 : vector<8x128xf32>
      %cst_43 = arith.constant dense<0.000000e+00> : vector<8xf32>
      %75 = vector.multi_reduction <add>, %74, %cst_43 [1] : vector<8x128xf32> to vector<8xf32>
      %76 = vector.shape_cast %75 : vector<8xf32> to vector<8x1xf32>
      %c0_44 = arith.constant 0 : index
      %c0_45 = arith.constant 0 : index
      %77 = vector.load %arg9[%c0_44, %c0_45] : memref<8x1xf32, #tpu.memory_space<vmem>>, vector<8x1xf32>
      tpu.vector_store %arg9[%c0_44, %c0_45], %76 {strides = array<i32>} : memref<8x1xf32, #tpu.memory_space<vmem>>, vector<8x1xf32>,
      %78 = arith.mulf %58, %64 : vector<8x1xf32>
      %79 = arith.mulf %78, %64 : vector<8x1xf32>
      %cst_46 = arith.constant 2.000000e+00 : f32
      %80 = vector.broadcast %cst_46 : f32 to vector<8x1xf32>
      %81 = arith.mulf %79, %80 : vector<8x1xf32>
      %82 = math.exp %81 : vector<8x1xf32>
      %cst_47 = arith.constant 0.000000e+00 : f32
      %83 = vector.broadcast %cst_47 : f32 to vector<8x1xf32>
      %84 = arith.subf %83, %82 : vector<8x1xf32>
      %c0_48 = arith.constant 0 : index
      %c0_49 = arith.constant 0 : index
      %85 = vector.load %arg10[%c0_48, %c0_49] : memref<8x1xf32, #tpu.memory_space<vmem>>, vector<8x1xf32>
      tpu.vector_store %arg10[%c0_48, %c0_49], %84 {strides = array<i32>} : memref<8x1xf32, #tpu.memory_space<vmem>>, vector<8x1xf32>,
      %86 = arith.mulf %61, %67 : vector<8x1xf32>
      %87 = arith.mulf %86, %67 : vector<8x1xf32>
      %cst_50 = arith.constant 2.000000e+00 : f32
      %88 = vector.broadcast %cst_50 : f32 to vector<8x1xf32>
      %89 = arith.mulf %87, %88 : vector<8x1xf32>
      %90 = math.exp %89 : vector<8x1xf32>
      %cst_51 = arith.constant 0.000000e+00 : f32
      %91 = vector.broadcast %cst_51 : f32 to vector<8x1xf32>
      %92 = arith.subf %91, %90 : vector<8x1xf32>
      %c0_52 = arith.constant 0 : index
      %c0_53 = arith.constant 0 : index
      %93 = vector.load %arg11[%c0_52, %c0_53] : memref<8x1xf32, #tpu.memory_space<vmem>>, vector<8x1xf32>
      tpu.vector_store %arg11[%c0_52, %c0_53], %92 {strides = array<i32>} : memref<8x1xf32, #tpu.memory_space<vmem>>, vector<8x1xf32>,
    } else {
    }
    %c0 = arith.constant 0 : index
    %c0_1 = arith.constant 0 : index
    %3 = vector.load %arg4[%c0, %c0_1] : memref<8x128xf32, #tpu.memory_space<vmem>>, vector<8x128xf32>
    %c0_2 = arith.constant 0 : index
    %c0_3 = arith.constant 0 : index
    %4 = vector.load %arg5[%c0_2, %c0_3] : memref<8x128xf32, #tpu.memory_space<vmem>>, vector<8x128xf32>
    %5 = arith.mulf %3, %3 : vector<8x128xf32>
    %cst = arith.constant dense<0.000000e+00> : vector<8xf32>
    %6 = vector.multi_reduction <add>, %5, %cst [1] : vector<8x128xf32> to vector<8xf32>
    %7 = vector.shape_cast %6 : vector<8xf32> to vector<8x1xf32>
    %cst_4 = arith.constant 1.000000e-24 : f32
    %8 = vector.broadcast %cst_4 : f32 to vector<8x1xf32>
    %9 = arith.maximumf %7, %8 : vector<8x1xf32>
    %10 = math.rsqrt %9 : vector<8x1xf32>
    %cst_5 = arith.constant 2.000000e+00 : f32
    %11 = vector.broadcast %cst_5 : f32 to vector<8x1xf32>
    %12 = arith.mulf %11, %10 : vector<8x1xf32>
    %13 = arith.mulf %4, %4 : vector<8x128xf32>
    %cst_6 = arith.constant dense<0.000000e+00> : vector<8xf32>
    %14 = vector.multi_reduction <add>, %13, %cst_6 [1] : vector<8x128xf32> to vector<8xf32>
    %15 = vector.shape_cast %14 : vector<8xf32> to vector<8x1xf32>
    %cst_7 = arith.constant 1.000000e-24 : f32
    %16 = vector.broadcast %cst_7 : f32 to vector<8x1xf32>
    %17 = arith.maximumf %15, %16 : vector<8x1xf32>
    %18 = math.rsqrt %17 : vector<8x1xf32>
    %cst_8 = arith.constant 2.000000e+00 : f32
    %19 = vector.broadcast %cst_8 : f32 to vector<8x1xf32>
    %20 = arith.mulf %19, %18 : vector<8x1xf32>
    %21 = vector.broadcast %12 : vector<8x1xf32> to vector<8x128xf32>
    %22 = arith.mulf %3, %21 : vector<8x128xf32>
    %23 = vector.broadcast %20 : vector<8x1xf32> to vector<8x128xf32>
    %24 = arith.mulf %4, %23 : vector<8x128xf32>
    %c0_9 = arith.constant 0 : index
    %c0_10 = arith.constant 0 : index
    %25 = vector.load %arg7[%c0_9, %c0_10] : memref<8x128xf32, #tpu.memory_space<vmem>>, vector<8x128xf32>
    %c0_11 = arith.constant 0 : index
    %c0_12 = arith.constant 0 : index
    %26 = vector.load %arg8[%c0_11, %c0_12] : memref<8x128xf32, #tpu.memory_space<vmem>>, vector<8x128xf32>
    %cst_13 = arith.constant dense<0.000000e+00> : vector<8x8xf32>
    %27 = tpu.matmul %25, %22, %cst_13 {dimension_numbers = #tpu.dot_dimension_numbers<[1], [1], [0], [0], [0, 0, 1, 0], [], []>} : vector<8x128xf32>, vector<8x128xf32>, vector<8x8xf32> -> vector<8x8xf32>
    %cst_14 = arith.constant dense<0.000000e+00> : vector<8x8xf32>
    %28 = tpu.matmul %25, %24, %cst_14 {dimension_numbers = #tpu.dot_dimension_numbers<[1], [1], [0], [0], [0, 0, 1, 0], [], []>} : vector<8x128xf32>, vector<8x128xf32>, vector<8x8xf32> -> vector<8x8xf32>
    %cst_15 = arith.constant dense<0.000000e+00> : vector<8x8xf32>
    %29 = tpu.matmul %26, %22, %cst_15 {dimension_numbers = #tpu.dot_dimension_numbers<[1], [1], [0], [0], [0, 0, 1, 0], [], []>} : vector<8x128xf32>, vector<8x128xf32>, vector<8x8xf32> -> vector<8x8xf32>
    %cst_16 = arith.constant dense<0.000000e+00> : vector<8x8xf32>
    %30 = tpu.matmul %26, %24, %cst_16 {dimension_numbers = #tpu.dot_dimension_numbers<[1], [1], [0], [0], [0, 0, 1, 0], [], []>} : vector<8x128xf32>, vector<8x128xf32>, vector<8x8xf32> -> vector<8x8xf32>
    %c0_17 = arith.constant 0 : index
    %c0_18 = arith.constant 0 : index
    %31 = vector.load %arg10[%c0_17, %c0_18] : memref<8x1xf32, #tpu.memory_space<vmem>>, vector<8x1xf32>
    %32 = math.exp %27 : vector<8x8xf32>
    %cst_19 = arith.constant dense<0.000000e+00> : vector<8xf32>
    %33 = vector.multi_reduction <add>, %32, %cst_19 [1] : vector<8x8xf32> to vector<8xf32>
    %34 = vector.shape_cast %33 : vector<8xf32> to vector<8x1xf32>
    %35 = math.exp %28 : vector<8x8xf32>
    %cst_20 = arith.constant dense<0.000000e+00> : vector<8xf32>
    %36 = vector.multi_reduction <add>, %35, %cst_20 [1] : vector<8x8xf32> to vector<8xf32>
    %37 = vector.shape_cast %36 : vector<8xf32> to vector<8x1xf32>
    %38 = arith.addf %34, %37 : vector<8x1xf32>
    %39 = arith.addf %31, %38 : vector<8x1xf32>
    %c0_21 = arith.constant 0 : index
    %c0_22 = arith.constant 0 : index
    %40 = vector.load %arg10[%c0_21, %c0_22] : memref<8x1xf32, #tpu.memory_space<vmem>>, vector<8x1xf32>
    tpu.vector_store %arg10[%c0_21, %c0_22], %39 {strides = array<i32>} : memref<8x1xf32, #tpu.memory_space<vmem>>, vector<8x1xf32>,
    %c0_23 = arith.constant 0 : index
    %c0_24 = arith.constant 0 : index
    %41 = vector.load %arg11[%c0_23, %c0_24] : memref<8x1xf32, #tpu.memory_space<vmem>>, vector<8x1xf32>
    %42 = math.exp %29 : vector<8x8xf32>
    %cst_25 = arith.constant dense<0.000000e+00> : vector<8xf32>
    %43 = vector.multi_reduction <add>, %42, %cst_25 [1] : vector<8x8xf32> to vector<8xf32>
    %44 = vector.shape_cast %43 : vector<8xf32> to vector<8x1xf32>
    %45 = math.exp %30 : vector<8x8xf32>
    %cst_26 = arith.constant dense<0.000000e+00> : vector<8xf32>
    %46 = vector.multi_reduction <add>, %45, %cst_26 [1] : vector<8x8xf32> to vector<8xf32>
    %47 = vector.shape_cast %46 : vector<8xf32> to vector<8x1xf32>
    %48 = arith.addf %44, %47 : vector<8x1xf32>
    %49 = arith.addf %41, %48 : vector<8x1xf32>
    %c0_27 = arith.constant 0 : index
    %c0_28 = arith.constant 0 : index
    %50 = vector.load %arg11[%c0_27, %c0_28] : memref<8x1xf32, #tpu.memory_space<vmem>>, vector<8x1xf32>
    tpu.vector_store %arg11[%c0_27, %c0_28], %49 {strides = array<i32>} : memref<8x1xf32, #tpu.memory_space<vmem>>, vector<8x1xf32>,
    %c0_i32_29 = arith.constant 0 : i32
    %51 = arith.cmpi eq, %arg1, %c0_i32_29 : i32
    %52 = arith.extui %51 : i1 to i32
    %c0_i32_30 = arith.constant 0 : i32
    %53 = arith.cmpi ne, %52, %c0_i32_30 : i32
    scf.if %53 {
      %c0_31 = arith.constant 0 : index
      %c0_32 = arith.constant 0 : index
      %54 = vector.load %arg10[%c0_31, %c0_32] : memref<8x1xf32, #tpu.memory_space<vmem>>, vector<8x1xf32>
      %55 = math.log %54 : vector<8x1xf32>
      %c0_33 = arith.constant 0 : index
      %c0_34 = arith.constant 0 : index
      %56 = vector.load %arg11[%c0_33, %c0_34] : memref<8x1xf32, #tpu.memory_space<vmem>>, vector<8x1xf32>
      %57 = math.log %56 : vector<8x1xf32>
      %58 = arith.addf %55, %57 : vector<8x1xf32>
      %c0_35 = arith.constant 0 : index
      %c0_36 = arith.constant 0 : index
      %59 = vector.load %arg9[%c0_35, %c0_36] : memref<8x1xf32, #tpu.memory_space<vmem>>, vector<8x1xf32>
      %cst_37 = arith.constant 4.000000e+00 : f32
      %60 = vector.broadcast %cst_37 : f32 to vector<8x1xf32>
      %61 = arith.mulf %60, %59 : vector<8x1xf32>
      %62 = arith.subf %58, %61 : vector<8x1xf32>
      %c0_38 = arith.constant 0 : index
      %c0_39 = arith.constant 0 : index
      %63 = vector.load %arg6[%c0_38, %c0_39] : memref<8x1xf32, #tpu.memory_space<vmem>>, vector<8x1xf32>
      tpu.vector_store %arg6[%c0_38, %c0_39], %62 {strides = array<i32>} : memref<8x1xf32, #tpu.memory_space<vmem>>, vector<8x1xf32>,
    } else {
    }
    return
  }
  func.func @transform_0(%arg0: i32, %arg1: i32) -> (i32, i32) {
    %c0_i32 = arith.constant 0 : i32
    %c0_i32_0 = arith.constant 0 : i32
    return %arg0, %c0_i32 : i32, i32
  }
  func.func @transform_1(%arg0: i32, %arg1: i32) -> (i32, i32) {
    %c0_i32 = arith.constant 0 : i32
    %c0_i32_0 = arith.constant 0 : i32
    return %arg0, %c0_i32 : i32, i32
  }
  func.func @transform_2(%arg0: i32, %arg1: i32) -> (i32, i32) {
    %c0_i32 = arith.constant 0 : i32
    %c0_i32_0 = arith.constant 0 : i32
    return %arg1, %c0_i32 : i32, i32
  }
  func.func @transform_3(%arg0: i32, %arg1: i32) -> (i32, i32) {
    %c0_i32 = arith.constant 0 : i32
    %c0_i32_0 = arith.constant 0 : i32
    return %arg1, %c0_i32 : i32, i32
  }
  func.func @transform_4(%arg0: i32, %arg1: i32) -> (i32, i32) {
    %c0_i32 = arith.constant 0 : i32
    %c0_i32_0 = arith.constant 0 : i32
    return %arg0, %c0_i32 : i32, i32
  }
}

</mosaic_0001>

<llo_original>
// kernel: tpu_custom_call.1
$region0: #{tpu_custom_call.1}
  #allocation0 [shape = 'u32[]', space=smem, size = 0x4, offset = 0x4, fixed_abs, tag = 'smem constant byte address 0x4 - core index']
  #allocation1 [shape = 'u32[144,128]{1,0:T(1,128)}', space=vmem, size = 0x12000, scoped, tag = 'internal scratch']
  #allocation2 [shape = 'f32[8,128]{1,0:T(8,128)}', space=vmem, size = 0x1000, scoped, tag = 'scratch operand']
  #allocation3 [shape = 'f32[8,128]{1,0:T(8,128)}', space=vmem, size = 0x1000, scoped, tag = 'scratch operand']
  #allocation4 [shape = 'f32[8,1]{1,0:T(8,128)}', space=vmem, size = 0x1000, scoped, tag = 'scratch operand']
  #allocation5 [shape = 'f32[8,1]{1,0:T(8,128)}', space=vmem, size = 0x1000, scoped, tag = 'scratch operand']
  #allocation6 [shape = 'f32[8,1]{1,0:T(8,128)}', space=vmem, size = 0x1000, scoped, tag = 'scratch operand']
  %s0 = inlined_call_operand.hbm [shape: f32[8,128], index: 0, kind: input, shape index: {}]
  %s1 = inlined_call_operand.hbm [shape: f32[8,128], index: 1, kind: input, shape index: {}]
  %s2 = inlined_call_operand.hbm [shape: f32[8,128], index: 2, kind: input, shape index: {}]
  %s3 = inlined_call_operand.vmem [shape: f32[8,128], index: 3, kind: input, shape index: {}]
  %s4 = inlined_call_operand.vmem [shape: f32[8,1], index: 4, kind: output, shape index: {}]
  %s5 = sld [smem:[#allocation0]]
  $region46: #{tpu_custom_call.1} parent=0
    _
  %s7 = ssub.s32 1, %s5
  %s8 = scalar_select 0, %s7, %s5
  $region1: #{tpu_custom_call.1} parent=0
    #allocation7 [shape = 'u8[4096]{0}', space=vmem, size = 0x1000, scoped, tag = 'input window, operand 0, single buffered']
    #allocation8 [shape = 's32[1]{0}', space=sflag, size = 0x4, scoped, tag = 'scoped memory for tpu_custom_call.1']
    #allocation9 [shape = 'u8[4096]{0}', space=vmem, size = 0x1000, scoped, tag = 'input window, operand 1, single buffered']
    #allocation10 [shape = 's32[1]{0}', space=sflag, size = 0x4, scoped, tag = 'scoped memory for tpu_custom_call.1']
    #allocation11 [shape = 'u8[4096]{0}', space=vmem, size = 0x1000, scoped, tag = 'input window, operand 2, single buffered']
    %9 = vsyncpa [#allocation8], 0
    %10 = vsyncpa [#allocation10], 0
    // Predicated region
    $region2: #{tpu_custom_call.1} parent=1 // pred_check
      _
    $region3: #{tpu_custom_call.1} parent=1 // pred_check_branch
      %12 = sbr.rel (0) target = $region5
    $region4: #{tpu_custom_call.1} parent=1 // pred_region
      %s14 = ssub.s32 128, 128
      %15 = vsyncadd [#allocation8], %s14
      %s17 = sshll.u32 [#allocation7], 4
      %s18 = int_to_ptr.vmem [resolvable:$true] %s17
      %20 = dma.hbm_to_vmem [thread:$0]  %s0, 128, %s18, [#allocation8]
    $region5: #{tpu_custom_call.1} parent=1 // pred_fallthru
      _
    // Predicated region
    $region6: #{tpu_custom_call.1} parent=1 // pred_check
      _
    $region7: #{tpu_custom_call.1} parent=1 // pred_check_branch
      %22 = sbr.rel (0) target = $region9
    $region8: #{tpu_custom_call.1} parent=1 // pred_region
      %s24 = ssub.s32 128, 128
      %25 = vsyncadd [#allocation10], %s24
      %s27 = sshll.u32 [#allocation9], 4
      %s28 = int_to_ptr.vmem [resolvable:$true] %s27
      %30 = dma.hbm_to_vmem [thread:$0]  %s1, 128, %s28, [#allocation10]
    $region9: #{tpu_custom_call.1} parent=1 // pred_fallthru
      _
    // Predicated region
    $region10: #{tpu_custom_call.1} parent=1 // pred_check
      _
    $region11: #{tpu_custom_call.1} parent=1 // pred_check_branch
      %32 = sbr.rel (0) target = $region13
    $region12: #{tpu_custom_call.1} parent=1 // pred_region
      %s34 = ssub.s32 128, 128
      %35 = vsyncadd [#allocation10], %s34
      %s37 = sshll.u32 [#allocation11], 4
      %s38 = int_to_ptr.vmem [resolvable:$true] %s37
      %40 = dma.hbm_to_vmem [thread:$0]  %s2, 128, %s38, [#allocation10]
    $region13: #{tpu_custom_call.1} parent=1 // pred_fallthru
      _
    // Predicated region
    $region14: #{tpu_custom_call.1} parent=1 // pred_check
      _
    $region15: #{tpu_custom_call.1} parent=1 // pred_check_branch
      %42 = sbr.rel (0) target = $region17
    $region16: #{tpu_custom_call.1} parent=1 // pred_region
      _
    $region17: #{tpu_custom_call.1} parent=1 // pred_fallthru
      _
    // Predicated region
    $region18: #{tpu_custom_call.1} parent=1 // pred_check
      _
    $region19: #{tpu_custom_call.1} parent=1 // pred_check_branch
      %44 = sbr.rel (0) target = $region21
    $region20: #{tpu_custom_call.1} parent=1 // pred_region
      %45 = dma.done [#allocation8], 128
    $region21: #{tpu_custom_call.1} parent=1 // pred_fallthru
      _
    // Predicated region
    $region22: #{tpu_custom_call.1} parent=1 // pred_check
      _
    $region23: #{tpu_custom_call.1} parent=1 // pred_check_branch
      %47 = sbr.rel (0) target = $region25
    $region24: #{tpu_custom_call.1} parent=1 // pred_region
      %48 = dma.done [#allocation10], 128
    $region25: #{tpu_custom_call.1} parent=1 // pred_fallthru
      _
    // Predicated region
    $region26: #{tpu_custom_call.1} parent=1 // pred_check
      _
    $region27: #{tpu_custom_call.1} parent=1 // pred_check_branch
      %50 = sbr.rel (0) target = $region29
    $region28: #{tpu_custom_call.1} parent=1 // pred_region
      %51 = dma.done [#allocation10], 128
    $region29: #{tpu_custom_call.1} parent=1 // pred_fallthru
      _
    %p52 = scmp.eq.s32.totalorder 0, 0
    // Predicated region
    $region30: #{tpu_custom_call.1} parent=1 // pred_check
      %p53 = pneg %p52
    $region31: #{tpu_custom_call.1} parent=1 // pred_check_branch
      %55 = sbr.rel (%p53) target = $region33
    $region32: #{tpu_custom_call.1} parent=1 // pred_region
      %v56 = vld [vmem:[#allocation7] sm:$0xff]
      %v57 = vld [vmem:[#allocation9] sm:$0xff]
      %v58 = vmul.f32 %v56, %v56
      %59 = vadd.xlane.f32.xlu0 %v58
      %v60 = vpop.xlane.xlu0 %59
      %v61 = vmul.f32 %v57, %v57
      %62 = vadd.xlane.f32.xlu0 %v61
      %v63 = vpop.xlane.xlu0 %62
      %v64 = vmax.f32 %v60, 1e-24
      %v65 = vrsqrt.pop %v64
      %v66 = vmax.f32 %v63, 1e-24
      %v67 = vrsqrt.pop %v66
      %v68 = vmul.f32 %v56, %v65
      %v69 = vmul.f32 %v57, %v67
      %70 = vst [vmem:[#allocation2] sm:$0xff] %v68
      %71 = vst [vmem:[#allocation3] sm:$0xff] %v69
      %v72 = vmul.f32 %v68, %v69
      %73 = vadd.xlane.f32.xlu0 %v72
      %v74 = vpop.xlane.xlu0 %73
      %vm75 = vcmask 7168
      %76 = vst.msk [vmem:[#allocation4] sm:$0xff] %vm75, %v74
      %v77 = vmul.f32 %v60, %v65
      %v78 = vmul.f32 %v77, %v65
      %v79 = vmul.f32 %v78, 2.0
      %v80 = vmul.f32 %v79, 1.442695
      %v81 = vpow.pop %v80
      %v82 = vsub.f32 0.0, %v81
      %83 = vst.msk [vmem:[#allocation5] sm:$0xff] %vm75, %v82
      %v84 = vmul.f32 %v63, %v67
      %v85 = vmul.f32 %v84, %v67
      %v86 = vmul.f32 %v85, 2.0
      %v87 = vmul.f32 %v86, 1.442695
      %v88 = vpow.pop %v87
      %v89 = vsub.f32 0.0, %v88
      %90 = vst.msk [vmem:[#allocation6] sm:$0xff] %vm75, %v89
    $region33: #{tpu_custom_call.1} parent=1 // pred_fallthru
      _
    %v91 = vld [vmem:[#allocation11] sm:$0xff]
    %v92 = vld [vmem:[%s3] sm:$0xff]
    %v93 = vmul.f32 %v91, %v91
    %94 = vadd.xlane.f32.xlu0 %v93
    %v95 = vpop.xlane.xlu0 %94
    %v96 = vmax.f32 %v95, 1e-24
    %v97 = vrsqrt.pop %v96
    %v98 = vmul.f32 %v97, 2.0
    %v99 = vmul.f32 %v92, %v92
    %100 = vadd.xlane.f32.xlu0 %v99
    %v101 = vpop.xlane.xlu0 %100
    %v102 = vmax.f32 %v101, 1e-24
    %v103 = vrsqrt.pop %v102
    %v104 = vmul.f32 %v103, 2.0
    %v105 = vmul.f32 %v91, %v98
    %v106 = vmul.f32 %v92, %v104
    %v107 = vld [vmem:[#allocation2] sm:$0xff]
    %v108 = vld [vmem:[#allocation3] sm:$0xff]
    %109 = vmatprep.subr.mxu0 0.0
    %110 = vmatpush1.xpose.msra.mxu0 %v105
    %111 = vmatprep.subr.mxu0 0.0
    %112 = vmatpush1.xpose.msra.mxu0 0.0
    %113 = vmatprep.subr.mxu0 0.0
    %114 = vmatpush1.xpose.msra.mxu0 0.0
    %115 = vmatprep.subr.mxu0 0.0
    %116 = vmatpush1.xpose.msra.mxu0 0.0
    %117 = vmatprep.subr.mxu0 0.0
    %118 = vmatpush1.xpose.msra.mxu0 0.0
    %119 = vmatprep.subr.mxu0 0.0
    %120 = vmatpush1.xpose.msra.mxu0 0.0
    %121 = vmatprep.subr.mxu0 0.0
    %122 = vmatpush1.xpose.msra.mxu0 0.0
    %123 = vmatprep.subr.mxu0 0.0
    %124 = vmatpush1.xpose.msra.mxu0 0.0
    %125 = vmatprep.subr.mxu0 0.0
    %126 = vmatpush1.xpose.msra.mxu0 0.0
    %127 = vmatprep.subr.mxu0 0.0
    %128 = vmatpush1.xpose.msra.mxu0 0.0
    %129 = vmatprep.subr.mxu0 0.0
    %130 = vmatpush1.xpose.msra.mxu0 0.0
    %131 = vmatprep.subr.mxu0 0.0
    %132 = vmatpush1.xpose.msra.mxu0 0.0
    %133 = vmatprep.subr.mxu0 0.0
    %134 = vmatpush1.xpose.msra.mxu0 0.0
    %135 = vmatprep.subr.mxu0 0.0
    %136 = vmatpush1.xpose.msra.mxu0 0.0
    %137 = vmatprep.subr.mxu0 0.0
    %138 = vmatpush1.xpose.msra.mxu0 0.0
    %139 = vmatprep.subr.mxu0 0.0
    %140 = vmatpush1.xpose.msra.mxu0 0.0
    %141 = vmatprep.subr.mxu0 0.0
    %142 = vmatpush1.xpose.msra.mxu0 0.0
    %143 = vmatprep.subr.mxu0 0.0
    %144 = vmatpush1.xpose.msra.mxu0 0.0
    %145 = vmatprep.subr.mxu0 0.0
    %146 = vmatpush1.xpose.msra.mxu0 0.0
    %147 = vmatprep.subr.mxu0 0.0
    %148 = vmatpush1.xpose.msra.mxu0 0.0
    %149 = vmatprep.subr.mxu0 0.0
    %150 = vmatpush1.xpose.msra.mxu0 0.0
    %151 = vmatprep.subr.mxu0 0.0
    %152 = vmatpush1.xpose.msra.mxu0 0.0
    %153 = vmatprep.subr.mxu0 0.0
    %154 = vmatpush1.xpose.msra.mxu0 0.0
    %155 = vmatprep.subr.mxu0 0.0
    %156 = vmatpush1.xpose.msra.mxu0 0.0
    %157 = vmatprep.subr.mxu0 0.0
    %158 = vmatpush1.xpose.msra.mxu0 0.0
    %159 = vmatprep.subr.mxu0 0.0
    %160 = vmatpush1.xpose.msra.mxu0 0.0
    %161 = vmatprep.subr.mxu0 0.0
    %162 = vmatpush1.xpose.msra.mxu0 0.0
    %163 = vmatprep.subr.mxu0 0.0
    %164 = vmatpush1.xpose.msra.mxu0 0.0
    %165 = vmatprep.subr.mxu0 0.0
    %166 = vmatpush1.xpose.msra.mxu0 0.0
    %167 = vmatprep.subr.mxu0 0.0
    %168 = vmatpush1.xpose.msra.mxu0 0.0
    %169 = vmatprep.subr.mxu0 0.0
    %170 = vmatpush1.xpose.msra.mxu0 0.0
    %171 = vmatprep.subr.mxu0 0.0
    %172 = vmatpush1.xpose.msra.mxu0 0.0
    %173 = vmatprep.mubr.f32.mxu0 0.0
    %174 = vmatmul.mubr.f32.gmra.mrb[0].mxu0 %v107
    %v175 = vpop.f32.mrb[0].mxu0
    %v176 = vadd.f32 0.0, %v175
    %v177 = vpop.f32.mrb[0].mxu0
    %178 = vdwg.mxu0
    %179 = vmatprep.subr.mxu0 0.0
    %180 = vmatpush1.xpose.msra.mxu0 %v106
    %181 = vmatprep.subr.mxu0 0.0
    %182 = vmatpush1.xpose.msra.mxu0 0.0
    %183 = vmatprep.subr.mxu0 0.0
    %184 = vmatpush1.xpose.msra.mxu0 0.0
    %185 = vmatprep.subr.mxu0 0.0
    %186 = vmatpush1.xpose.msra.mxu0 0.0
    %187 = vmatprep.subr.mxu0 0.0
    %188 = vmatpush1.xpose.msra.mxu0 0.0
    %189 = vmatprep.subr.mxu0 0.0
    %190 = vmatpush1.xpose.msra.mxu0 0.0
    %191 = vmatprep.subr.mxu0 0.0
    %192 = vmatpush1.xpose.msra.mxu0 0.0
    %193 = vmatprep.subr.mxu0 0.0
    %194 = vmatpush1.xpose.msra.mxu0 0.0
    %195 = vmatprep.subr.mxu0 0.0
    %196 = vmatpush1.xpose.msra.mxu0 0.0
    %197 = vmatprep.subr.mxu0 0.0
    %198 = vmatpush1.xpose.msra.mxu0 0.0
    %199 = vmatprep.subr.mxu0 0.0
    %200 = vmatpush1.xpose.msra.mxu0 0.0
    %201 = vmatprep.subr.mxu0 0.0
    %202 = vmatpush1.xpose.msra.mxu0 0.0
    %203 = vmatprep.subr.mxu0 0.0
    %204 = vmatpush1.xpose.msra.mxu0 0.0
    %205 = vmatprep.subr.mxu0 0.0
    %206 = vmatpush1.xpose.msra.mxu0 0.0
    %207 = vmatprep.subr.mxu0 0.0
    %208 = vmatpush1.xpose.msra.mxu0 0.0
    %209 = vmatprep.subr.mxu0 0.0
    %210 = vmatpush1.xpose.msra.mxu0 0.0
    %211 = vmatprep.subr.mxu0 0.0
    %212 = vmatpush1.xpose.msra.mxu0 0.0
    %213 = vmatprep.subr.mxu0 0.0
    %214 = vmatpush1.xpose.msra.mxu0 0.0
    %215 = vmatprep.subr.mxu0 0.0
    %216 = vmatpush1.xpose.msra.mxu0 0.0
    %217 = vmatprep.subr.mxu0 0.0
    %218 = vmatpush1.xpose.msra.mxu0 0.0
    %219 = vmatprep.subr.mxu0 0.0
    %220 = vmatpush1.xpose.msra.mxu0 0.0
    %221 = vmatprep.subr.mxu0 0.0
    %222 = vmatpush1.xpose.msra.mxu0 0.0
    %223 = vmatprep.subr.mxu0 0.0
    %224 = vmatpush1.xpose.msra.mxu0 0.0
    %225 = vmatprep.subr.mxu0 0.0
    %226 = vmatpush1.xpose.msra.mxu0 0.0
    %227 = vmatprep.subr.mxu0 0.0
    %228 = vmatpush1.xpose.msra.mxu0 0.0
    %229 = vmatprep.subr.mxu0 0.0
    %230 = vmatpush1.xpose.msra.mxu0 0.0
    %231 = vmatprep.subr.mxu0 0.0
    %232 = vmatpush1.xpose.msra.mxu0 0.0
    %233 = vmatprep.subr.mxu0 0.0
    %234 = vmatpush1.xpose.msra.mxu0 0.0
    %235 = vmatprep.subr.mxu0 0.0
    %236 = vmatpush1.xpose.msra.mxu0 0.0
    %237 = vmatprep.subr.mxu0 0.0
    %238 = vmatpush1.xpose.msra.mxu0 0.0
    %239 = vmatprep.subr.mxu0 0.0
    %240 = vmatpush1.xpose.msra.mxu0 0.0
    %241 = vmatprep.subr.mxu0 0.0
    %242 = vmatpush1.xpose.msra.mxu0 0.0
    %243 = vmatprep.mubr.f32.mxu0 0.0
    %244 = vmatmul.mubr.f32.gmra.mrb[0].mxu0 %v107
    %v245 = vpop.f32.mrb[0].mxu0
    %v246 = vadd.f32 0.0, %v245
    %v247 = vpop.f32.mrb[0].mxu0
    %248 = vdwg.mxu0
    %249 = vmatprep.subr.mxu0 0.0
    %250 = vmatpush1.xpose.msra.mxu0 %v105
    %251 = vmatprep.subr.mxu0 0.0
    %252 = vmatpush1.xpose.msra.mxu0 0.0
    %253 = vmatprep.subr.mxu0 0.0
    %254 = vmatpush1.xpose.msra.mxu0 0.0
    %255 = vmatprep.subr.mxu0 0.0
    %256 = vmatpush1.xpose.msra.mxu0 0.0
    %257 = vmatprep.subr.mxu0 0.0
    %258 = vmatpush1.xpose.msra.mxu0 0.0
    %259 = vmatprep.subr.mxu0 0.0
    %260 = vmatpush1.xpose.msra.mxu0 0.0
    %261 = vmatprep.subr.mxu0 0.0
    %262 = vmatpush1.xpose.msra.mxu0 0.0
    %263 = vmatprep.subr.mxu0 0.0
    %264 = vmatpush1.xpose.msra.mxu0 0.0
    %265 = vmatprep.subr.mxu0 0.0
    %266 = vmatpush1.xpose.msra.mxu0 0.0
    %267 = vmatprep.subr.mxu0 0.0
    %268 = vmatpush1.xpose.msra.mxu0 0.0
    %269 = vmatprep.subr.mxu0 0.0
    %270 = vmatpush1.xpose.msra.mxu0 0.0
    %271 = vmatprep.subr.mxu0 0.0
    %272 = vmatpush1.xpose.msra.mxu0 0.0
    %273 = vmatprep.subr.mxu0 0.0
    %274 = vmatpush1.xpose.msra.mxu0 0.0
    %275 = vmatprep.subr.mxu0 0.0
    %276 = vmatpush1.xpose.msra.mxu0 0.0
    %277 = vmatprep.subr.mxu0 0.0
    %278 = vmatpush1.xpose.msra.mxu0 0.0
    %279 = vmatprep.subr.mxu0 0.0
    %280 = vmatpush1.xpose.msra.mxu0 0.0
    %281 = vmatprep.subr.mxu0 0.0
    %282 = vmatpush1.xpose.msra.mxu0 0.0
    %283 = vmatprep.subr.mxu0 0.0
    %284 = vmatpush1.xpose.msra.mxu0 0.0
    %285 = vmatprep.subr.mxu0 0.0
    %286 = vmatpush1.xpose.msra.mxu0 0.0
    %287 = vmatprep.subr.mxu0 0.0
    %288 = vmatpush1.xpose.msra.mxu0 0.0
    %289 = vmatprep.subr.mxu0 0.0
    %290 = vmatpush1.xpose.msra.mxu0 0.0
    %291 = vmatprep.subr.mxu0 0.0
    %292 = vmatpush1.xpose.msra.mxu0 0.0
    %293 = vmatprep.subr.mxu0 0.0
    %294 = vmatpush1.xpose.msra.mxu0 0.0
    %295 = vmatprep.subr.mxu0 0.0
    %296 = vmatpush1.xpose.msra.mxu0 0.0
    %297 = vmatprep.subr.mxu0 0.0
    %298 = vmatpush1.xpose.msra.mxu0 0.0
    %299 = vmatprep.subr.mxu0 0.0
    %300 = vmatpush1.xpose.msra.mxu0 0.0
    %301 = vmatprep.subr.mxu0 0.0
    %302 = vmatpush1.xpose.msra.mxu0 0.0
    %303 = vmatprep.subr.mxu0 0.0
    %304 = vmatpush1.xpose.msra.mxu0 0.0
    %305 = vmatprep.subr.mxu0 0.0
    %306 = vmatpush1.xpose.msra.mxu0 0.0
    %307 = vmatprep.subr.mxu0 0.0
    %308 = vmatpush1.xpose.msra.mxu0 0.0
    %309 = vmatprep.subr.mxu0 0.0
    %310 = vmatpush1.xpose.msra.mxu0 0.0
    %311 = vmatprep.subr.mxu0 0.0
    %312 = vmatpush1.xpose.msra.mxu0 0.0
    %313 = vmatprep.mubr.f32.mxu0 0.0
    %314 = vmatmul.mubr.f32.gmra.mrb[0].mxu0 %v108
    %v315 = vpop.f32.mrb[0].mxu0
    %v316 = vadd.f32 0.0, %v315
    %v317 = vpop.f32.mrb[0].mxu0
    %318 = vdwg.mxu0
    %319 = vmatprep.subr.mxu0 0.0
    %320 = vmatpush1.xpose.msra.mxu0 %v106
    %321 = vmatprep.subr.mxu0 0.0
    %322 = vmatpush1.xpose.msra.mxu0 0.0
    %323 = vmatprep.subr.mxu0 0.0
    %324 = vmatpush1.xpose.msra.mxu0 0.0
    %325 = vmatprep.subr.mxu0 0.0
    %326 = vmatpush1.xpose.msra.mxu0 0.0
    %327 = vmatprep.subr.mxu0 0.0
    %328 = vmatpush1.xpose.msra.mxu0 0.0
    %329 = vmatprep.subr.mxu0 0.0
    %330 = vmatpush1.xpose.msra.mxu0 0.0
    %331 = vmatprep.subr.mxu0 0.0
    %332 = vmatpush1.xpose.msra.mxu0 0.0
    %333 = vmatprep.subr.mxu0 0.0
    %334 = vmatpush1.xpose.msra.mxu0 0.0
    %335 = vmatprep.subr.mxu0 0.0
    %336 = vmatpush1.xpose.msra.mxu0 0.0
    %337 = vmatprep.subr.mxu0 0.0
    %338 = vmatpush1.xpose.msra.mxu0 0.0
    %339 = vmatprep.subr.mxu0 0.0
    %340 = vmatpush1.xpose.msra.mxu0 0.0
    %341 = vmatprep.subr.mxu0 0.0
    %342 = vmatpush1.xpose.msra.mxu0 0.0
    %343 = vmatprep.subr.mxu0 0.0
    %344 = vmatpush1.xpose.msra.mxu0 0.0
    %345 = vmatprep.subr.mxu0 0.0
    %346 = vmatpush1.xpose.msra.mxu0 0.0
    %347 = vmatprep.subr.mxu0 0.0
    %348 = vmatpush1.xpose.msra.mxu0 0.0
    %349 = vmatprep.subr.mxu0 0.0
    %350 = vmatpush1.xpose.msra.mxu0 0.0
    %351 = vmatprep.subr.mxu0 0.0
    %352 = vmatpush1.xpose.msra.mxu0 0.0
    %353 = vmatprep.subr.mxu0 0.0
    %354 = vmatpush1.xpose.msra.mxu0 0.0
    %355 = vmatprep.subr.mxu0 0.0
    %356 = vmatpush1.xpose.msra.mxu0 0.0
    %357 = vmatprep.subr.mxu0 0.0
    %358 = vmatpush1.xpose.msra.mxu0 0.0
    %359 = vmatprep.subr.mxu0 0.0
    %360 = vmatpush1.xpose.msra.mxu0 0.0
    %361 = vmatprep.subr.mxu0 0.0
    %362 = vmatpush1.xpose.msra.mxu0 0.0
    %363 = vmatprep.subr.mxu0 0.0
    %364 = vmatpush1.xpose.msra.mxu0 0.0
    %365 = vmatprep.subr.mxu0 0.0
    %366 = vmatpush1.xpose.msra.mxu0 0.0
    %367 = vmatprep.subr.mxu0 0.0
    %368 = vmatpush1.xpose.msra.mxu0 0.0
    %369 = vmatprep.subr.mxu0 0.0
    %370 = vmatpush1.xpose.msra.mxu0 0.0
    %371 = vmatprep.subr.mxu0 0.0
    %372 = vmatpush1.xpose.msra.mxu0 0.0
    %373 = vmatprep.subr.mxu0 0.0
    %374 = vmatpush1.xpose.msra.mxu0 0.0
    %375 = vmatprep.subr.mxu0 0.0
    %376 = vmatpush1.xpose.msra.mxu0 0.0
    %377 = vmatprep.subr.mxu0 0.0
    %378 = vmatpush1.xpose.msra.mxu0 0.0
    %379 = vmatprep.subr.mxu0 0.0
    %380 = vmatpush1.xpose.msra.mxu0 0.0
    %381 = vmatprep.subr.mxu0 0.0
    %382 = vmatpush1.xpose.msra.mxu0 0.0
    %383 = vmatprep.mubr.f32.mxu0 0.0
    %384 = vmatmul.mubr.f32.gmra.mrb[0].mxu0 %v108
    %v385 = vpop.f32.mrb[0].mxu0
    %v386 = vadd.f32 0.0, %v385
    %v387 = vpop.f32.mrb[0].mxu0
    %388 = vdwg.mxu0
    %v389 = vld [vmem:[#allocation5] sm:$0xff]
    %v390 = vmul.f32 %v176, 1.442695
    %v391 = vpow.pop %v390
    %vm392 = vcmask 64512
    %v393 = vsel %vm392, %v391, 0.0
    %394 = vadd.xlane.f32.xlu0 %v393
    %v395 = vpop.xlane.xlu0 %394
    %v396 = vmul.f32 %v246, 1.442695
    %v397 = vpow.pop %v396
    %v398 = vsel %vm392, %v397, 0.0
    %399 = vadd.xlane.f32.xlu0 %v398
    %v400 = vpop.xlane.xlu0 %399
    %v401 = vadd.f32 %v395, %v400
    %v402 = vadd.f32 %v389, %v401
    %vm403 = vcmask 7168
    %404 = vst.msk [vmem:[#allocation5] sm:$0xff] %vm403, %v402
    %v405 = vld [vmem:[#allocation6] sm:$0xff]
    %v406 = vmul.f32 %v316, 1.442695
    %v407 = vpow.pop %v406
    %v408 = vsel %vm392, %v407, 0.0
    %409 = vadd.xlane.f32.xlu0 %v408
    %v410 = vpop.xlane.xlu0 %409
    %v411 = vmul.f32 %v386, 1.442695
    %v412 = vpow.pop %v411
    %v413 = vsel %vm392, %v412, 0.0
    %414 = vadd.xlane.f32.xlu0 %v413
    %v415 = vpop.xlane.xlu0 %414
    %v416 = vadd.f32 %v410, %v415
    %v417 = vadd.f32 %v405, %v416
    %418 = vst.msk [vmem:[#allocation6] sm:$0xff] %vm403, %v417
    // Predicated region
    $region34: #{tpu_custom_call.1} parent=1 // pred_check
      %p419 = pneg %p52
    $region35: #{tpu_custom_call.1} parent=1 // pred_check_branch
      %421 = sbr.rel (%p419) target = $region37
    $region36: #{tpu_custom_call.1} parent=1 // pred_region
      %v422 = vld [vmem:[#allocation5] sm:$0xff]
      %v423 = vlog2.pop %v422
      %v424 = vmul.f32 %v423, 0.6931472
      %v425 = vld [vmem:[#allocation6] sm:$0xff]
      %v426 = vlog2.pop %v425
      %v427 = vmul.f32 %v426, 0.6931472
      %v428 = vadd.f32 %v424, %v427
      %v429 = vld [vmem:[#allocation4] sm:$0xff]
      %v430 = vmul.f32 %v429, 4.0
      %v431 = vsub.f32 %v428, %v430
      %432 = vst.msk [vmem:[%s4] sm:$0xff] %vm403, %v431
    $region37: #{tpu_custom_call.1} parent=1 // pred_fallthru
      _
    // Predicated region
    $region38: #{tpu_custom_call.1} parent=1 // pred_check
      _
    $region39: #{tpu_custom_call.1} parent=1 // pred_check_branch
      %434 = sbr.rel (0) target = $region41
    $region40: #{tpu_custom_call.1} parent=1 // pred_region
      _
    $region41: #{tpu_custom_call.1} parent=1 // pred_fallthru
      _
    // Predicated region
    $region42: #{tpu_custom_call.1} parent=1 // pred_check
      _
    $region43: #{tpu_custom_call.1} parent=1 // pred_check_branch
      %436 = sbr.rel (0) target = $region45
    $region44: #{tpu_custom_call.1} parent=1 // pred_region
      _
    $region45: #{tpu_custom_call.1} parent=1 // pred_fallthru
      _
    %437 = vsyncpa [#allocation8], 1
    %438 = vsyncpa [#allocation10], 1

</llo_original>
